<compile_context>
chip_gen: v6e
topology: v6e:2x2x1
jax: 0.10.0
libtpu: 0.0.40
codegen_flags: <defaults>
</compile_context>

<pallas_src>
import functools

import jax
import jax.numpy as jnp
from jax.experimental import pallas as pl
from jax.experimental.pallas import tpu as pltpu

_SQRT_2_OVER_PI = 0.7978845608028654        # sqrt(2/pi)
_GELU_C2 = 0.044715 * _SQRT_2_OVER_PI       # folded constant


def _mae_mlp_kernel(x_ref, w1_ref, b1_ref, w2_ref, b2_ref, o_ref):
    # x_ref : (tm, D) f32      w1_ref: (D, H) bf16     b1_ref: (1, H) f32
    # w2_ref: (H, D) bf16      b2_ref: (1, D) f32      o_ref : (tm, D) f32
    x = x_ref[...].astype(jnp.bfloat16)     # in-kernel cast (VPU), x read as f32

    # linear1 (bf16 MXU matmul, f32 accumulate) + bias in f32
    h = jnp.dot(x, w1_ref[...], preferred_element_type=jnp.float32) + b1_ref[...]

    # GELU, tanh approximation (matches torch F.gelu(..., approximate='tanh')).
    # Kept in f32; tanh rides the EUP slot, polynomial uses minimal VPU muls.
    h2 = h * h
    inner = h * (_SQRT_2_OVER_PI + _GELU_C2 * h2)
    g = 0.5 * h * (1.0 + jnp.tanh(inner))

    # linear2 (bf16 MXU matmul, f32 accumulate) + bias in f32
    y = jnp.dot(g.astype(jnp.bfloat16), w2_ref[...],
                preferred_element_type=jnp.float32) + b2_ref[...]
    o_ref[...] = y.astype(o_ref.dtype)


def _round_up(x, m):
    return ((x + m - 1) // m) * m


def _pick_tm(M):
    """MXU/lane-aligned row tile.

    Small M -> single tile (grid of 1).  Mid/large M -> at least two grid
    steps (so ("parallel",) feeds both v7x TensorCores), 128-aligned, capped
    at 1024 rows (the (tm, H) f32 GELU temps stay ~2 MiB each).
    """
    if M <= 128:
        return _round_up(M, 8)
    return min(1024, _round_up(pl.cdiv(M, 2), 128))


def prepare_params(w1, b1, w2, b2):
    """One-time parameter prep, hoisted out of the per-call path.

    Weights -> bf16 (MXU-native, halves weight DMA); biases -> f32 (1, N).
    Weight layout is (in_features, out_features) = PyTorch nn.Linear.weight.T.
    """
    return (w1.astype(jnp.bfloat16),
            b1.astype(jnp.float32).reshape(1, -1),
            w2.astype(jnp.bfloat16),
            b2.astype(jnp.float32).reshape(1, -1))


@functools.partial(jax.jit, static_argnames=("tm",))
def mae_mlp(x, w1b, b1f, w2b, b2f, *, tm=None):
    """x: (B, S, D) float32. Weights already prepared via prepare_params()."""
    B, S, D = x.shape
    H = w1b.shape[1]
    M = B * S

    if tm is None:
        tm = _pick_tm(M)
    grid = (pl.cdiv(M, tm),)   # ragged last tile handled by Pallas masking

    x2 = x.reshape(M, D)       # no pad: OOB rows in the last tile are masked
                               # on write; rows are fully independent.

    cost = pl.CostEstimate(
        flops=4 * M * D * H,                 # two matmuls, 2*M*D*H each
        transcendentals=M * H,               # one tanh per hidden element
        bytes_accessed=(4 * M * D            # x read (f32)
                        + 4 * M * D          # out write (f32)
                        + 2 * D * H + 2 * H * D   # bf16 weights
                        + 4 * H + 4 * D),    # f32 biases
    )

    out2 = pl.pallas_call(
        _mae_mlp_kernel,
        out_shape=jax.ShapeDtypeStruct((M, D), x.dtype),
        grid_spec=pltpu.PrefetchScalarGridSpec(
            num_scalar_prefetch=0,
            grid=grid,
            in_specs=[
                pl.BlockSpec((tm, D), lambda i: (i, 0)),   # x rows (f32)
                pl.BlockSpec((D, H), lambda i: (0, 0)),    # w1 (VMEM-resident)
                pl.BlockSpec((1, H), lambda i: (0, 0)),    # b1 (resident)
                pl.BlockSpec((H, D), lambda i: (0, 0)),    # w2 (resident)
                pl.BlockSpec((1, D), lambda i: (0, 0)),    # b2 (resident)
            ],
            out_specs=pl.BlockSpec((tm, D), lambda i: (i, 0)),
        ),
        compiler_params=pltpu.CompilerParams(
            dimension_semantics=("parallel",),   # shards rows across TCs (v7x)
            vmem_limit_bytes=32 * 1024 * 1024,   # lift v5e's 16 MiB default
        ),
        cost_estimate=cost,
    )(x2, w1b, b1f, w2b, b2f)

    return out2.reshape(B, S, D)


def _reference(x, w1, b1, w2, b2):
    h = x @ w1 + b1
    c = jnp.sqrt(jnp.float32(2.0 / jnp.pi))
    g = 0.5 * h * (1.0 + jnp.tanh(c * (h + 0.044715 * h**3)))
    return g @ w2 + b2


if __name__ == "__main__":
    # Config: enc_embed_dim = 128, enc_mlp_layer_dim = enc_embed_dim * 4 = 512
    B, S, D = 2, 8, 128
    H = 4 * D

    key = jax.random.PRNGKey(0)
    kx, kw1, kb1, kw2, kb2 = jax.random.split(key, 5)

    x = jax.random.normal(kx, (B, S, D), dtype=jnp.float32)
    # deterministic parameter init (synthetic, not a checkpoint)
    w1 = jax.random.normal(kw1, (D, H), dtype=jnp.float32) * (1.0 / jnp.sqrt(D))
    b1 = jax.random.normal(kb1, (1, H), dtype=jnp.float32) * 0.01
    w2 = jax.random.normal(kw2, (H, D), dtype=jnp.float32) * (1.0 / jnp.sqrt(H))
    b2 = jax.random.normal(kb2, (1, D), dtype=jnp.float32) * 0.01

    # One-time parameter prep (hoisted out of the forward path).
    w1b, b1f, w2b, b2f = prepare_params(w1, b1, w2, b2)

    out = mae_mlp(x, w1b, b1f, w2b, b2f)   # tm auto-selected (=16 here, grid=(1,))
    out = jax.block_until_ready(out)

    ref = _reference(x.reshape(B * S, D), w1, b1, w2, b2).reshape(B, S, D)
    assert out.shape == (B, S, D)
    # Tolerance loosened vs an all-f32 version because matmul operands are
    # bf16 (f32 accumulation): observed error is O(1e-2).
    max_err = float(jnp.max(jnp.abs(out - ref)))
    assert jnp.allclose(out, ref, atol=5e-2, rtol=5e-2), (
        f"mismatch vs reference (max abs err={max_err})")

    print("KERNEL_OK")
</pallas_src>

<mosaic_0001>
module attributes {stable_mosaic.version = 11 : i64} {
  func.func @_mae_mlp_kernel(%arg0: i32, %arg1: memref<16x128xf32, #tpu.memory_space<vmem>>, %arg2: memref<128x512xbf16, #tpu.memory_space<vmem>>, %arg3: memref<1x512xf32, #tpu.memory_space<vmem>>, %arg4: memref<512x128xbf16, #tpu.memory_space<vmem>>, %arg5: memref<1x128xf32, #tpu.memory_space<vmem>>, %arg6: memref<16x128xf32, #tpu.memory_space<vmem>>) attributes {dimension_semantics = [#tpu.dimension_semantics<parallel>], iteration_bounds = array<i64: 1>, scalar_prefetch = 0 : i64, scratch_operands = 0 : i64, tpu.core_type = #tpu.core_type<tc>, window_params = [{transform_indices = @transform_0, window_bounds = array<i64: 16, 128>}, {pipeline_mode = #tpu.pipeline_mode<synchronous>, transform_indices = @transform_1, window_bounds = array<i64: 128, 512>}, {pipeline_mode = #tpu.pipeline_mode<synchronous>, transform_indices = @transform_2, window_bounds = array<i64: 1, 512>}, {pipeline_mode = #tpu.pipeline_mode<synchronous>, transform_indices = @transform_3, window_bounds = array<i64: 512, 128>}, {pipeline_mode = #tpu.pipeline_mode<synchronous>, transform_indices = @transform_4, window_bounds = array<i64: 1, 128>}, {transform_indices = @transform_5, window_bounds = array<i64: 16, 128>}]} {
    %c0 = arith.constant 0 : index
    %c0_0 = arith.constant 0 : index
    %0 = vector.load %arg1[%c0, %c0_0] : memref<16x128xf32, #tpu.memory_space<vmem>>, vector<16x128xf32>
    %1 = arith.truncf %0 : vector<16x128xf32> to vector<16x128xbf16>
    %c0_1 = arith.constant 0 : index
    %c0_2 = arith.constant 0 : index
    %2 = vector.load %arg2[%c0_1, %c0_2] : memref<128x512xbf16, #tpu.memory_space<vmem>>, vector<128x512xbf16>
    %cst = arith.constant dense<0.000000e+00> : vector<16x512xf32>
    %3 = tpu.matmul %1, %2, %cst {dimension_numbers = #tpu.dot_dimension_numbers<[1], [0], [0], [1], [0, 0, 1, 1], [], []>} : vector<16x128xbf16>, vector<128x512xbf16>, vector<16x512xf32> -> vector<16x512xf32>
    %c0_3 = arith.constant 0 : index
    %c0_4 = arith.constant 0 : index
    %4 = vector.load %arg3[%c0_3, %c0_4] : memref<1x512xf32, #tpu.memory_space<vmem>>, vector<1x512xf32>
    %5 = vector.broadcast %4 : vector<1x512xf32> to vector<16x512xf32>
    %6 = arith.addf %3, %5 : vector<16x512xf32>
    %7 = arith.mulf %6, %6 : vector<16x512xf32>
    %cst_5 = arith.constant 0.0356774069 : f32
    %8 = vector.broadcast %cst_5 : f32 to vector<16x512xf32>
    %9 = arith.mulf %8, %7 : vector<16x512xf32>
    %cst_6 = arith.constant 0.797884583 : f32
    %10 = vector.broadcast %cst_6 : f32 to vector<16x512xf32>
    %11 = arith.addf %10, %9 : vector<16x512xf32>
    %12 = arith.mulf %6, %11 : vector<16x512xf32>
    %cst_7 = arith.constant 5.000000e-01 : f32
    %13 = vector.broadcast %cst_7 : f32 to vector<16x512xf32>
    %14 = arith.mulf %13, %6 : vector<16x512xf32>
    %15 = math.tanh %12 : vector<16x512xf32>
    %cst_8 = arith.constant 1.000000e+00 : f32
    %16 = vector.broadcast %cst_8 : f32 to vector<16x512xf32>
    %17 = arith.addf %16, %15 : vector<16x512xf32>
    %18 = arith.mulf %14, %17 : vector<16x512xf32>
    %19 = arith.truncf %18 : vector<16x512xf32> to vector<16x512xbf16>
    %c0_9 = arith.constant 0 : index
    %c0_10 = arith.constant 0 : index
    %20 = vector.load %arg4[%c0_9, %c0_10] : memref<512x128xbf16, #tpu.memory_space<vmem>>, vector<512x128xbf16>
    %cst_11 = arith.constant dense<0.000000e+00> : vector<16x128xf32>
    %21 = tpu.matmul %19, %20, %cst_11 {dimension_numbers = #tpu.dot_dimension_numbers<[1], [0], [0], [1], [0, 0, 1, 1], [], []>} : vector<16x512xbf16>, vector<512x128xbf16>, vector<16x128xf32> -> vector<16x128xf32>
    %c0_12 = arith.constant 0 : index
    %c0_13 = arith.constant 0 : index
    %22 = vector.load %arg5[%c0_12, %c0_13] : memref<1x128xf32, #tpu.memory_space<vmem>>, vector<1x128xf32>
    %23 = vector.broadcast %22 : vector<1x128xf32> to vector<16x128xf32>
    %24 = arith.addf %21, %23 : vector<16x128xf32>
    %c0_14 = arith.constant 0 : index
    %c0_15 = arith.constant 0 : index
    %25 = vector.load %arg6[%c0_14, %c0_15] : memref<16x128xf32, #tpu.memory_space<vmem>>, vector<16x128xf32>
    tpu.vector_store %arg6[%c0_14, %c0_15], %24 {strides = array<i32>} : memref<16x128xf32, #tpu.memory_space<vmem>>, vector<16x128xf32>,
    return
  }
  func.func @transform_0(%arg0: i32) -> (i32, i32) {
    %c0_i32 = arith.constant 0 : i32
    %c0_i32_0 = arith.constant 0 : i32
    return %arg0, %c0_i32 : i32, i32
  }
  func.func @transform_1(%arg0: i32) -> (i32, i32) {
    %c0_i32 = arith.constant 0 : i32
    %c0_i32_0 = arith.constant 0 : i32
    %c0_i32_1 = arith.constant 0 : i32
    return %c0_i32, %c0_i32_0 : i32, i32
  }
  func.func @transform_2(%arg0: i32) -> (i32, i32) {
    %c0_i32 = arith.constant 0 : i32
    %c0_i32_0 = arith.constant 0 : i32
    %c0_i32_1 = arith.constant 0 : i32
    return %c0_i32, %c0_i32_0 : i32, i32
  }
  func.func @transform_3(%arg0: i32) -> (i32, i32) {
    %c0_i32 = arith.constant 0 : i32
    %c0_i32_0 = arith.constant 0 : i32
    %c0_i32_1 = arith.constant 0 : i32
    return %c0_i32, %c0_i32_0 : i32, i32
  }
  func.func @transform_4(%arg0: i32) -> (i32, i32) {
    %c0_i32 = arith.constant 0 : i32
    %c0_i32_0 = arith.constant 0 : i32
    %c0_i32_1 = arith.constant 0 : i32
    return %c0_i32, %c0_i32_0 : i32, i32
  }
  func.func @transform_5(%arg0: i32) -> (i32, i32) {
    %c0_i32 = arith.constant 0 : i32
    %c0_i32_0 = arith.constant 0 : i32
    return %arg0, %c0_i32 : i32, i32
  }
}

</mosaic_0001>

<llo_original>
// kernel: mae_mlp.1
$region0: #{mae_mlp.1}
  #allocation0 [shape = 'u32[]', space=smem, size = 0x4, offset = 0x4, fixed_abs, tag = 'smem constant byte address 0x4 - core index']
  #allocation1 [shape = 'u32[144,128]{1,0:T(1,128)}', space=vmem, size = 0x12000, scoped, tag = 'internal scratch']
  %s0 = inlined_call_operand.hbm [shape: f32[16,128], index: 0, kind: input, shape index: {}]
  %s1 = inlined_call_operand.hbm [shape: bf16[128,512], index: 1, kind: input, shape index: {}]
  %s2 = inlined_call_operand.vmem [shape: f32[1,512], index: 2, kind: input, shape index: {}]
  %s3 = inlined_call_operand.hbm [shape: bf16[512,128], index: 3, kind: input, shape index: {}]
  %s4 = inlined_call_operand.vmem [shape: f32[1,128], index: 4, kind: input, shape index: {}]
  %s5 = inlined_call_operand.hbm [shape: f32[16,128], index: 5, kind: output, shape index: {}]
  %s6 = sld [smem:[#allocation0]]
  $region42: #{mae_mlp.1} parent=0
    _
  %s8 = ssub.s32 1, %s6
  %s9 = scalar_select 0, %s8, %s6
  $region1: #{mae_mlp.1} parent=0
    #allocation2 [shape = 'u8[8192]{0}', space=vmem, size = 0x2000, scoped, tag = 'input window, operand 0, single buffered']
    #allocation3 [shape = 's32[1]{0}', space=sflag, size = 0x4, scoped, tag = 'scoped memory for mae_mlp.1']
    #allocation4 [shape = 's32[1]{0}', space=sflag, size = 0x4, scoped, tag = 'scoped memory for mae_mlp.1']
    #allocation5 [shape = 'u8[131072]{0}', space=vmem, size = 0x20000, scoped, tag = 'input window, operand 1, single buffered']
    #allocation6 [shape = 's32[1]{0}', space=sflag, size = 0x4, scoped, tag = 'scoped memory for mae_mlp.1']
    #allocation7 [shape = 'u8[131072]{0}', space=vmem, size = 0x20000, scoped, tag = 'input window, operand 3, single buffered']
    #allocation8 [shape = 'u8[8192]{0}', space=vmem, size = 0x2000, scoped, tag = 'output window, operand 0, single buffered']
    %10 = vsyncpa [#allocation3], 0
    %11 = vsyncpa [#allocation6], 0
    %12 = vsyncpa [#allocation4], 0
    // Predicated region
    $region2: #{mae_mlp.1} parent=1 // pred_check
      _
    $region3: #{mae_mlp.1} parent=1 // pred_check_branch
      %14 = sbr.rel (0) target = $region5
    $region4: #{mae_mlp.1} parent=1 // pred_region
      %s16 = ssub.s32 256, 256
      %17 = vsyncadd [#allocation3], %s16
      %s18 = sshll.u32 [#allocation2], 4
      %s19 = int_to_ptr.vmem [resolvable:$true] %s18
      %24 = dma.hbm_to_vmem [thread:$0]  %s0, 256, %s19, [#allocation3], 128, 128, 8
    $region5: #{mae_mlp.1} parent=1 // pred_fallthru
      _
    // Predicated region
    $region6: #{mae_mlp.1} parent=1 // pred_check
      _
    $region7: #{mae_mlp.1} parent=1 // pred_check_branch
      %26 = sbr.rel (0) target = $region9
    $region8: #{mae_mlp.1} parent=1 // pred_region
      %s28 = ssub.s32 4096, 4096
      %29 = vsyncadd [#allocation6], %s28
      %s30 = sshll.u32 [#allocation5], 4
      %s31 = int_to_ptr.vmem [resolvable:$true] %s30
      %36 = dma.hbm_to_vmem [thread:$0]  %s1, 4096, %s31, [#allocation6], 256, 256, 16
    $region9: #{mae_mlp.1} parent=1 // pred_fallthru
      _
    // Predicated region
    $region10: #{mae_mlp.1} parent=1 // pred_check
      _
    $region11: #{mae_mlp.1} parent=1 // pred_check_branch
      %38 = sbr.rel (0) target = $region13
    $region12: #{mae_mlp.1} parent=1 // pred_region
      _
    $region13: #{mae_mlp.1} parent=1 // pred_fallthru
      _
    // Predicated region
    $region14: #{mae_mlp.1} parent=1 // pred_check
      _
    $region15: #{mae_mlp.1} parent=1 // pred_check_branch
      %40 = sbr.rel (0) target = $region17
    $region16: #{mae_mlp.1} parent=1 // pred_region
      %s42 = ssub.s32 4096, 4096
      %43 = vsyncadd [#allocation6], %s42
      %s44 = sshll.u32 [#allocation7], 4
      %s45 = int_to_ptr.vmem [resolvable:$true] %s44
      %50 = dma.hbm_to_vmem [thread:$0]  %s3, 4096, %s45, [#allocation6], 64, 64, 4
    $region17: #{mae_mlp.1} parent=1 // pred_fallthru
      _
    // Predicated region
    $region18: #{mae_mlp.1} parent=1 // pred_check
      _
    $region19: #{mae_mlp.1} parent=1 // pred_check_branch
      %52 = sbr.rel (0) target = $region21
    $region20: #{mae_mlp.1} parent=1 // pred_region
      _
    $region21: #{mae_mlp.1} parent=1 // pred_fallthru
      _
    // Predicated region
    $region22: #{mae_mlp.1} parent=1 // pred_check
      _
    $region23: #{mae_mlp.1} parent=1 // pred_check_branch
      %54 = sbr.rel (0) target = $region25
    $region24: #{mae_mlp.1} parent=1 // pred_region
      %55 = dma.done [#allocation3], 256
    $region25: #{mae_mlp.1} parent=1 // pred_fallthru
      _
    // Predicated region
    $region26: #{mae_mlp.1} parent=1 // pred_check
      _
    $region27: #{mae_mlp.1} parent=1 // pred_check_branch
      %57 = sbr.rel (0) target = $region29
    $region28: #{mae_mlp.1} parent=1 // pred_region
      %58 = dma.done [#allocation6], 4096
    $region29: #{mae_mlp.1} parent=1 // pred_fallthru
      _
    // Predicated region
    $region30: #{mae_mlp.1} parent=1 // pred_check
      _
    $region31: #{mae_mlp.1} parent=1 // pred_check_branch
      %60 = sbr.rel (0) target = $region33
    $region32: #{mae_mlp.1} parent=1 // pred_region
      %61 = dma.done [#allocation6], 4096
    $region33: #{mae_mlp.1} parent=1 // pred_fallthru
      _
    %v63 = vld [vmem:[#allocation2] sm:$0xff]
    %v64 = vld [vmem:[#allocation2 + $0x8] sm:$0xff]
    %v65 = vpack.c.bf16 %v64, %v63
    %v66 = vld [vmem:[#allocation5] sm:$0xff]
    %v67 = vld [vmem:[#allocation5 + $0x8] sm:$0xff]
    %v68 = vld [vmem:[#allocation5 + $0x10] sm:$0xff]
    %v69 = vld [vmem:[#allocation5 + $0x18] sm:$0xff]
    %v70 = vld [vmem:[#allocation5 + $0x20] sm:$0xff]
    %v71 = vld [vmem:[#allocation5 + $0x28] sm:$0xff]
    %v72 = vld [vmem:[#allocation5 + $0x30] sm:$0xff]
    %v73 = vld [vmem:[#allocation5 + $0x38] sm:$0xff]
    %v74 = vld [vmem:[#allocation5 + $0x40] sm:$0xff]
    %v75 = vld [vmem:[#allocation5 + $0x48] sm:$0xff]
    %v76 = vld [vmem:[#allocation5 + $0x50] sm:$0xff]
    %v77 = vld [vmem:[#allocation5 + $0x58] sm:$0xff]
    %v78 = vld [vmem:[#allocation5 + $0x60] sm:$0xff]
    %v79 = vld [vmem:[#allocation5 + $0x68] sm:$0xff]
    %v80 = vld [vmem:[#allocation5 + $0x70] sm:$0xff]
    %v81 = vld [vmem:[#allocation5 + $0x78] sm:$0xff]
    %v82 = vld [vmem:[#allocation5 + $0x80] sm:$0xff]
    %v83 = vld [vmem:[#allocation5 + $0x88] sm:$0xff]
    %v84 = vld [vmem:[#allocation5 + $0x90] sm:$0xff]
    %v85 = vld [vmem:[#allocation5 + $0x98] sm:$0xff]
    %v86 = vld [vmem:[#allocation5 + $0xa0] sm:$0xff]
    %v87 = vld [vmem:[#allocation5 + $0xa8] sm:$0xff]
    %v88 = vld [vmem:[#allocation5 + $0xb0] sm:$0xff]
    %v89 = vld [vmem:[#allocation5 + $0xb8] sm:$0xff]
    %v90 = vld [vmem:[#allocation5 + $0xc0] sm:$0xff]
    %v91 = vld [vmem:[#allocation5 + $0xc8] sm:$0xff]
    %v92 = vld [vmem:[#allocation5 + $0xd0] sm:$0xff]
    %v93 = vld [vmem:[#allocation5 + $0xd8] sm:$0xff]
    %v94 = vld [vmem:[#allocation5 + $0xe0] sm:$0xff]
    %v95 = vld [vmem:[#allocation5 + $0xe8] sm:$0xff]
    %v96 = vld [vmem:[#allocation5 + $0xf0] sm:$0xff]
    %v97 = vld [vmem:[#allocation5 + $0xf8] sm:$0xff]
    %v98 = vld [vmem:[%s2] sm:$0xf]
    %v100 = vlaneseq
    %v101 = vshrl.u32 %v100, 7
    %v102 = vsub.s32 0, %v101
    %v103 = vrot.slane %v98, %v102
    %v104 = vlaneseq
    %v105 = vshrl.u32 %v104, 7
    %v106 = vsub.s32 1, %v105
    %v107 = vrot.slane %v98, %v106
    %v108 = vlaneseq
    %v109 = vshrl.u32 %v108, 7
    %v110 = vsub.s32 2, %v109
    %v111 = vrot.slane %v98, %v110
    %v112 = vlaneseq
    %v113 = vshrl.u32 %v112, 7
    %v114 = vsub.s32 3, %v113
    %v115 = vrot.slane %v98, %v114
    %v152 = vunpack.c.l.b16 %v66
    %v153 = vunpack.c.h.b16 %v66
    %v154 = vunpack.c.l.b16 %v67
    %v155 = vunpack.c.h.b16 %v67
    %v156 = vunpack.c.l.b16 %v68
    %v157 = vunpack.c.h.b16 %v68
    %v158 = vunpack.c.l.b16 %v69
    %v159 = vunpack.c.h.b16 %v69
    %v160 = vunpack.c.l.b16 %v70
    %v161 = vunpack.c.h.b16 %v70
    %v162 = vunpack.c.l.b16 %v71
    %v163 = vunpack.c.h.b16 %v71
    %v164 = vunpack.c.l.b16 %v72
    %v165 = vunpack.c.h.b16 %v72
    %v166 = vunpack.c.l.b16 %v73
    %v167 = vunpack.c.h.b16 %v73
    %v168 = vunpack.c.l.b16 %v74
    %v169 = vunpack.c.h.b16 %v74
    %v170 = vunpack.c.l.b16 %v75
    %v171 = vunpack.c.h.b16 %v75
    %v172 = vunpack.c.l.b16 %v76
    %v173 = vunpack.c.h.b16 %v76
    %v174 = vunpack.c.l.b16 %v77
    %v175 = vunpack.c.h.b16 %v77
    %v176 = vunpack.c.l.b16 %v78
    %v177 = vunpack.c.h.b16 %v78
    %v178 = vunpack.c.l.b16 %v79
    %v179 = vunpack.c.h.b16 %v79
    %v180 = vunpack.c.l.b16 %v80
    %v181 = vunpack.c.h.b16 %v80
    %v182 = vunpack.c.l.b16 %v81
    %v183 = vunpack.c.h.b16 %v81
    %v184 = vunpack.c.l.b16 %v82
    %v185 = vunpack.c.h.b16 %v82
    %v186 = vunpack.c.l.b16 %v83
    %v187 = vunpack.c.h.b16 %v83
    %v188 = vunpack.c.l.b16 %v84
    %v189 = vunpack.c.h.b16 %v84
    %v190 = vunpack.c.l.b16 %v85
    %v191 = vunpack.c.h.b16 %v85
    %v192 = vunpack.c.l.b16 %v86
    %v193 = vunpack.c.h.b16 %v86
    %v194 = vunpack.c.l.b16 %v87
    %v195 = vunpack.c.h.b16 %v87
    %v196 = vunpack.c.l.b16 %v88
    %v197 = vunpack.c.h.b16 %v88
    %v198 = vunpack.c.l.b16 %v89
    %v199 = vunpack.c.h.b16 %v89
    %v200 = vunpack.c.l.b16 %v90
    %v201 = vunpack.c.h.b16 %v90
    %v202 = vunpack.c.l.b16 %v91
    %v203 = vunpack.c.h.b16 %v91
    %v204 = vunpack.c.l.b16 %v92
    %v205 = vunpack.c.h.b16 %v92
    %v206 = vunpack.c.l.b16 %v93
    %v207 = vunpack.c.h.b16 %v93
    %v208 = vunpack.c.l.b16 %v94
    %v209 = vunpack.c.h.b16 %v94
    %v210 = vunpack.c.l.b16 %v95
    %v211 = vunpack.c.h.b16 %v95
    %v212 = vunpack.c.l.b16 %v96
    %v213 = vunpack.c.h.b16 %v96
    %v214 = vunpack.c.l.b16 %v97
    %v215 = vunpack.c.h.b16 %v97
    %v216 = vpack.c.b16 %v156, %v152
    %v217 = vpack.c.b16 %v157, %v153
    %v218 = vpack.c.b16 %v158, %v154
    %v219 = vpack.c.b16 %v159, %v155
    %v220 = vpack.c.b16 %v164, %v160
    %v221 = vpack.c.b16 %v165, %v161
    %v222 = vpack.c.b16 %v166, %v162
    %v223 = vpack.c.b16 %v167, %v163
    %v224 = vpack.c.b16 %v172, %v168
    %v225 = vpack.c.b16 %v173, %v169
    %v226 = vpack.c.b16 %v174, %v170
    %v227 = vpack.c.b16 %v175, %v171
    %v228 = vpack.c.b16 %v180, %v176
    %v229 = vpack.c.b16 %v181, %v177
    %v230 = vpack.c.b16 %v182, %v178
    %v231 = vpack.c.b16 %v183, %v179
    %v232 = vpack.c.b16 %v188, %v184
    %v233 = vpack.c.b16 %v189, %v185
    %v234 = vpack.c.b16 %v190, %v186
    %v235 = vpack.c.b16 %v191, %v187
    %v236 = vpack.c.b16 %v196, %v192
    %v237 = vpack.c.b16 %v197, %v193
    %v238 = vpack.c.b16 %v198, %v194
    %v239 = vpack.c.b16 %v199, %v195
    %v240 = vpack.c.b16 %v204, %v200
    %v241 = vpack.c.b16 %v205, %v201
    %v242 = vpack.c.b16 %v206, %v202
    %v243 = vpack.c.b16 %v207, %v203
    %v244 = vpack.c.b16 %v212, %v208
    %v245 = vpack.c.b16 %v213, %v209
    %v246 = vpack.c.b16 %v214, %v210
    %v247 = vpack.c.b16 %v215, %v211
    %280 = vmatprep.subr.bf16.mxu0 %v245
    %281 = vmatpush1.bf16.msra.mxu0 %v244
    %282 = vmatprep.subr.bf16.mxu0 %v241
    %283 = vmatpush1.bf16.msra.mxu0 %v240
    %284 = vmatprep.subr.bf16.mxu0 %v237
    %285 = vmatpush1.bf16.msra.mxu0 %v236
    %286 = vmatprep.subr.bf16.mxu0 %v233
    %287 = vmatpush1.bf16.msra.mxu0 %v232
    %288 = vmatprep.subr.bf16.mxu0 %v229
    %289 = vmatpush1.bf16.msra.mxu0 %v228
    %290 = vmatprep.subr.bf16.mxu0 %v225
    %291 = vmatpush1.bf16.msra.mxu0 %v224
    %292 = vmatprep.subr.bf16.mxu0 %v221
    %293 = vmatpush1.bf16.msra.mxu0 %v220
    %294 = vmatprep.subr.bf16.mxu0 %v217
    %295 = vmatpush1.bf16.msra.mxu0 %v216
    %296 = vmatprep.subr.bf16.mxu0 0
    %297 = vmatpush2.bf16.msra.mxu0 0
    %298 = vmatprep.subr.bf16.mxu0 0
    %299 = vmatpush2.bf16.msra.mxu0 0
    %300 = vmatprep.subr.bf16.mxu0 0
    %301 = vmatpush2.bf16.msra.mxu0 0
    %302 = vmatprep.subr.bf16.mxu0 0
    %303 = vmatpush2.bf16.msra.mxu0 0
    %304 = vmatprep.subr.bf16.mxu0 0
    %305 = vmatpush2.bf16.msra.mxu0 0
    %306 = vmatprep.subr.bf16.mxu0 0
    %307 = vmatpush2.bf16.msra.mxu0 0
    %308 = vmatprep.subr.bf16.mxu0 0
    %309 = vmatpush2.bf16.msra.mxu0 0
    %310 = vmatprep.subr.bf16.mxu0 0
    %311 = vmatpush2.bf16.msra.mxu0 0
    %312 = vmatprep.mubr.bf16.mxu0 0
    %313 = vmatmul.mubr.bf16.gmra.mxu0 %v65
    %v314 = vpop.f32.mrf.mxu0
    %v315 = vadd.f32 %v103, %v314
    %v316 = vpop.f32.mrf.mxu0
    %v317 = vadd.f32 %v107, %v316
    %v318 = vpop.f32.mrf.mxu0
    %v319 = vadd.f32 %v103, %v318
    %v320 = vpop.f32.mrf.mxu0
    %v321 = vadd.f32 %v107, %v320
    %322 = vdwg.mxu0
    %323 = vmatprep.subr.bf16.mxu0 %v247
    %324 = vmatpush1.bf16.msra.mxu0 %v246
    %325 = vmatprep.subr.bf16.mxu0 %v243
    %326 = vmatpush1.bf16.msra.mxu0 %v242
    %327 = vmatprep.subr.bf16.mxu0 %v239
    %328 = vmatpush1.bf16.msra.mxu0 %v238
    %329 = vmatprep.subr.bf16.mxu0 %v235
    %330 = vmatpush1.bf16.msra.mxu0 %v234
    %331 = vmatprep.subr.bf16.mxu0 %v231
    %332 = vmatpush1.bf16.msra.mxu0 %v230
    %333 = vmatprep.subr.bf16.mxu0 %v227
    %334 = vmatpush1.bf16.msra.mxu0 %v226
    %335 = vmatprep.subr.bf16.mxu0 %v223
    %336 = vmatpush1.bf16.msra.mxu0 %v222
    %337 = vmatprep.subr.bf16.mxu0 %v219
    %338 = vmatpush1.bf16.msra.mxu0 %v218
    %339 = vmatprep.subr.bf16.mxu0 0
    %340 = vmatpush2.bf16.msra.mxu0 0
    %341 = vmatprep.subr.bf16.mxu0 0
    %342 = vmatpush2.bf16.msra.mxu0 0
    %343 = vmatprep.subr.bf16.mxu0 0
    %344 = vmatpush2.bf16.msra.mxu0 0
    %345 = vmatprep.subr.bf16.mxu0 0
    %346 = vmatpush2.bf16.msra.mxu0 0
    %347 = vmatprep.subr.bf16.mxu0 0
    %348 = vmatpush2.bf16.msra.mxu0 0
    %349 = vmatprep.subr.bf16.mxu0 0
    %350 = vmatpush2.bf16.msra.mxu0 0
    %351 = vmatprep.subr.bf16.mxu0 0
    %352 = vmatpush2.bf16.msra.mxu0 0
    %353 = vmatprep.subr.bf16.mxu0 0
    %354 = vmatpush2.bf16.msra.mxu0 0
    %355 = vmatprep.mubr.bf16.mxu0 0
    %356 = vmatmul.mubr.bf16.gmra.mxu0 %v65
    %v357 = vpop.f32.mrf.mxu0
    %v358 = vadd.f32 %v111, %v357
    %v359 = vpop.f32.mrf.mxu0
    %v360 = vadd.f32 %v115, %v359
    %v361 = vpop.f32.mrf.mxu0
    %v362 = vadd.f32 %v111, %v361
    %v363 = vpop.f32.mrf.mxu0
    %v364 = vadd.f32 %v115, %v363
    %365 = vdwg.mxu0
    %v366 = vmul.f32 %v315, %v315
    %v367 = vmul.f32 %v317, %v317
    %v368 = vmul.f32 %v358, %v358
    %v369 = vmul.f32 %v360, %v360
    %v370 = vmul.f32 %v319, %v319
    %v371 = vmul.f32 %v321, %v321
    %v372 = vmul.f32 %v362, %v362
    %v373 = vmul.f32 %v364, %v364
    %v374 = vmul.f32 %v366, 0.035677407
    %v375 = vmul.f32 %v367, 0.035677407
    %v376 = vmul.f32 %v368, 0.035677407
    %v377 = vmul.f32 %v369, 0.035677407
    %v378 = vmul.f32 %v370, 0.035677407
    %v379 = vmul.f32 %v371, 0.035677407
    %v380 = vmul.f32 %v372, 0.035677407
    %v381 = vmul.f32 %v373, 0.035677407
    %v382 = vadd.f32 %v374, 0.7978846
    %v383 = vadd.f32 %v375, 0.7978846
    %v384 = vadd.f32 %v376, 0.7978846
    %v385 = vadd.f32 %v377, 0.7978846
    %v386 = vadd.f32 %v378, 0.7978846
    %v387 = vadd.f32 %v379, 0.7978846
    %v388 = vadd.f32 %v380, 0.7978846
    %v389 = vadd.f32 %v381, 0.7978846
    %v390 = vmul.f32 %v315, %v382
    %v391 = vmul.f32 %v317, %v383
    %v392 = vmul.f32 %v358, %v384
    %v393 = vmul.f32 %v360, %v385
    %v394 = vmul.f32 %v319, %v386
    %v395 = vmul.f32 %v321, %v387
    %v396 = vmul.f32 %v362, %v388
    %v397 = vmul.f32 %v364, %v389
    %v398 = vmul.f32 %v315, 0.5
    %v399 = vmul.f32 %v317, 0.5
    %v400 = vmul.f32 %v358, 0.5
    %v401 = vmul.f32 %v360, 0.5
    %v402 = vmul.f32 %v319, 0.5
    %v403 = vmul.f32 %v321, 0.5
    %v404 = vmul.f32 %v362, 0.5
    %v405 = vmul.f32 %v364, 0.5
    %v406 = vtanh.pop %v390
    %v407 = vtanh.pop %v391
    %v408 = vtanh.pop %v392
    %v409 = vtanh.pop %v393
    %v410 = vtanh.pop %v394
    %v411 = vtanh.pop %v395
    %v412 = vtanh.pop %v396
    %v413 = vtanh.pop %v397
    %v414 = vadd.f32 %v406, 1.0
    %v415 = vadd.f32 %v407, 1.0
    %v416 = vadd.f32 %v408, 1.0
    %v417 = vadd.f32 %v409, 1.0
    %v418 = vadd.f32 %v410, 1.0
    %v419 = vadd.f32 %v411, 1.0
    %v420 = vadd.f32 %v412, 1.0
    %v421 = vadd.f32 %v413, 1.0
    %v422 = vmul.f32 %v398, %v414
    %v423 = vmul.f32 %v399, %v415
    %v424 = vmul.f32 %v400, %v416
    %v425 = vmul.f32 %v401, %v417
    %v426 = vmul.f32 %v402, %v418
    %v427 = vmul.f32 %v403, %v419
    %v428 = vmul.f32 %v404, %v420
    %v429 = vmul.f32 %v405, %v421
    %v430 = vpack.c.bf16 %v426, %v422
    %v431 = vpack.c.bf16 %v427, %v423
    %v432 = vpack.c.bf16 %v428, %v424
    %v433 = vpack.c.bf16 %v429, %v425
    %v434 = vld [vmem:[#allocation7] sm:$0xf]
    %v435 = vld [vmem:[#allocation7 + $0x4] sm:$0xf]
    %v436 = vld [vmem:[#allocation7 + $0x8] sm:$0xf]
    %v437 = vld [vmem:[#allocation7 + $0xc] sm:$0xf]
    %v438 = vld [vmem:[#allocation7 + $0x10] sm:$0xf]
    %v439 = vld [vmem:[#allocation7 + $0x14] sm:$0xf]
    %v440 = vld [vmem:[#allocation7 + $0x18] sm:$0xf]
    %v441 = vld [vmem:[#allocation7 + $0x1c] sm:$0xf]
    %v442 = vld [vmem:[#allocation7 + $0x20] sm:$0xf]
    %v443 = vld [vmem:[#allocation7 + $0x24] sm:$0xf]
    %v444 = vld [vmem:[#allocation7 + $0x28] sm:$0xf]
    %v445 = vld [vmem:[#allocation7 + $0x2c] sm:$0xf]
    %v446 = vld [vmem:[#allocation7 + $0x30] sm:$0xf]
    %v447 = vld [vmem:[#allocation7 + $0x34] sm:$0xf]
    %v448 = vld [vmem:[#allocation7 + $0x38] sm:$0xf]
    %v449 = vld [vmem:[#allocation7 + $0x3c] sm:$0xf]
    %v450 = vld [vmem:[#allocation7 + $0x40] sm:$0xf]
    %v451 = vld [vmem:[#allocation7 + $0x44] sm:$0xf]
    %v452 = vld [vmem:[#allocation7 + $0x48] sm:$0xf]
    %v453 = vld [vmem:[#allocation7 + $0x4c] sm:$0xf]
    %v454 = vld [vmem:[#allocation7 + $0x50] sm:$0xf]
    %v455 = vld [vmem:[#allocation7 + $0x54] sm:$0xf]
    %v456 = vld [vmem:[#allocation7 + $0x58] sm:$0xf]
    %v457 = vld [vmem:[#allocation7 + $0x5c] sm:$0xf]
    %v458 = vld [vmem:[#allocation7 + $0x60] sm:$0xf]
    %v459 = vld [vmem:[#allocation7 + $0x64] sm:$0xf]
    %v460 = vld [vmem:[#allocation7 + $0x68] sm:$0xf]
    %v461 = vld [vmem:[#allocation7 + $0x6c] sm:$0xf]
    %v462 = vld [vmem:[#allocation7 + $0x70] sm:$0xf]
    %v463 = vld [vmem:[#allocation7 + $0x74] sm:$0xf]
    %v464 = vld [vmem:[#allocation7 + $0x78] sm:$0xf]
    %v465 = vld [vmem:[#allocation7 + $0x7c] sm:$0xf]
    %v466 = vld [vmem:[#allocation7 + $0x80] sm:$0xf]
    %v467 = vld [vmem:[#allocation7 + $0x84] sm:$0xf]
    %v468 = vld [vmem:[#allocation7 + $0x88] sm:$0xf]
    %v469 = vld [vmem:[#allocation7 + $0x8c] sm:$0xf]
    %v470 = vld [vmem:[#allocation7 + $0x90] sm:$0xf]
    %v471 = vld [vmem:[#allocation7 + $0x94] sm:$0xf]
    %v472 = vld [vmem:[#allocation7 + $0x98] sm:$0xf]
    %v473 = vld [vmem:[#allocation7 + $0x9c] sm:$0xf]
    %v474 = vld [vmem:[#allocation7 + $0xa0] sm:$0xf]
    %v475 = vld [vmem:[#allocation7 + $0xa4] sm:$0xf]
    %v476 = vld [vmem:[#allocation7 + $0xa8] sm:$0xf]
    %v477 = vld [vmem:[#allocation7 + $0xac] sm:$0xf]
    %v478 = vld [vmem:[#allocation7 + $0xb0] sm:$0xf]
    %v479 = vld [vmem:[#allocation7 + $0xb4] sm:$0xf]
    %v480 = vld [vmem:[#allocation7 + $0xb8] sm:$0xf]
    %v481 = vld [vmem:[#allocation7 + $0xbc] sm:$0xf]
    %v482 = vld [vmem:[#allocation7 + $0xc0] sm:$0xf]
    %v483 = vld [vmem:[#allocation7 + $0xc4] sm:$0xf]
    %v484 = vld [vmem:[#allocation7 + $0xc8] sm:$0xf]
    %v485 = vld [vmem:[#allocation7 + $0xcc] sm:$0xf]
    %v486 = vld [vmem:[#allocation7 + $0xd0] sm:$0xf]
    %v487 = vld [vmem:[#allocation7 + $0xd4] sm:$0xf]
    %v488 = vld [vmem:[#allocation7 + $0xd8] sm:$0xf]
    %v489 = vld [vmem:[#allocation7 + $0xdc] sm:$0xf]
    %v490 = vld [vmem:[#allocation7 + $0xe0] sm:$0xf]
    %v491 = vld [vmem:[#allocation7 + $0xe4] sm:$0xf]
    %v492 = vld [vmem:[#allocation7 + $0xe8] sm:$0xf]
    %v493 = vld [vmem:[#allocation7 + $0xec] sm:$0xf]
    %v494 = vld [vmem:[#allocation7 + $0xf0] sm:$0xf]
    %v495 = vld [vmem:[#allocation7 + $0xf4] sm:$0xf]
    %v496 = vld [vmem:[#allocation7 + $0xf8] sm:$0xf]
    %v497 = vld [vmem:[#allocation7 + $0xfc] sm:$0xf]
    %v498 = vld [vmem:[%s4] sm:$0x1]
    %v500 = vlaneseq
    %v501 = vshrl.u32 %v500, 7
    %v502 = vsub.s32 0, %v501
    %v503 = vrot.slane %v498, %v502
    %v569 = vunpack.c.l.b16 %v434
    %v570 = vunpack.c.l.b16 %v435
    %v571 = vunpack.c.l.b16 %v436
    %v572 = vunpack.c.l.b16 %v437
    %v573 = vunpack.c.l.b16 %v438
    %v574 = vunpack.c.l.b16 %v439
    %v575 = vunpack.c.l.b16 %v440
    %v576 = vunpack.c.l.b16 %v441
    %v577 = vunpack.c.l.b16 %v442
    %v578 = vunpack.c.l.b16 %v443
    %v579 = vunpack.c.l.b16 %v444
    %v580 = vunpack.c.l.b16 %v445
    %v581 = vunpack.c.l.b16 %v446
    %v582 = vunpack.c.l.b16 %v447
    %v583 = vunpack.c.l.b16 %v448
    %v584 = vunpack.c.l.b16 %v449
    %v585 = vunpack.c.l.b16 %v450
    %v586 = vunpack.c.l.b16 %v451
    %v587 = vunpack.c.l.b16 %v452
    %v588 = vunpack.c.l.b16 %v453
    %v589 = vunpack.c.l.b16 %v454
    %v590 = vunpack.c.l.b16 %v455
    %v591 = vunpack.c.l.b16 %v456
    %v592 = vunpack.c.l.b16 %v457
    %v593 = vunpack.c.l.b16 %v458
    %v594 = vunpack.c.l.b16 %v459
    %v595 = vunpack.c.l.b16 %v460
    %v596 = vunpack.c.l.b16 %v461
    %v597 = vunpack.c.l.b16 %v462
    %v598 = vunpack.c.l.b16 %v463
    %v599 = vunpack.c.l.b16 %v464
    %v600 = vunpack.c.l.b16 %v465
    %v601 = vunpack.c.l.b16 %v466
    %v602 = vunpack.c.l.b16 %v467
    %v603 = vunpack.c.l.b16 %v468
    %v604 = vunpack.c.l.b16 %v469
    %v605 = vunpack.c.l.b16 %v470
    %v606 = vunpack.c.l.b16 %v471
    %v607 = vunpack.c.l.b16 %v472
    %v608 = vunpack.c.l.b16 %v473
    %v609 = vunpack.c.l.b16 %v474
    %v610 = vunpack.c.l.b16 %v475
    %v611 = vunpack.c.l.b16 %v476
    %v612 = vunpack.c.l.b16 %v477
    %v613 = vunpack.c.l.b16 %v478
    %v614 = vunpack.c.l.b16 %v479
    %v615 = vunpack.c.l.b16 %v480
    %v616 = vunpack.c.l.b16 %v481
    %v617 = vunpack.c.l.b16 %v482
    %v618 = vunpack.c.l.b16 %v483
    %v619 = vunpack.c.l.b16 %v484
    %v620 = vunpack.c.l.b16 %v485
    %v621 = vunpack.c.l.b16 %v486
    %v622 = vunpack.c.l.b16 %v487
    %v623 = vunpack.c.l.b16 %v488
    %v624 = vunpack.c.l.b16 %v489
    %v625 = vunpack.c.l.b16 %v490
    %v626 = vunpack.c.l.b16 %v491
    %v627 = vunpack.c.l.b16 %v492
    %v628 = vunpack.c.l.b16 %v493
    %v629 = vunpack.c.l.b16 %v494
    %v630 = vunpack.c.l.b16 %v495
    %v631 = vunpack.c.l.b16 %v496
    %v632 = vunpack.c.l.b16 %v497
    %v633 = vpack.c.b16 %v570, %v569
    %v634 = vpack.c.b16 %v572, %v571
    %v635 = vpack.c.b16 %v574, %v573
    %v636 = vpack.c.b16 %v576, %v575
    %v637 = vpack.c.b16 %v578, %v577
    %v638 = vpack.c.b16 %v580, %v579
    %v639 = vpack.c.b16 %v582, %v581
    %v640 = vpack.c.b16 %v584, %v583
    %v641 = vpack.c.b16 %v586, %v585
    %v642 = vpack.c.b16 %v588, %v587
    %v643 = vpack.c.b16 %v590, %v589
    %v644 = vpack.c.b16 %v592, %v591
    %v645 = vpack.c.b16 %v594, %v593
    %v646 = vpack.c.b16 %v596, %v595
    %v647 = vpack.c.b16 %v598, %v597
    %v648 = vpack.c.b16 %v600, %v599
    %v649 = vpack.c.b16 %v602, %v601
    %v650 = vpack.c.b16 %v604, %v603
    %v651 = vpack.c.b16 %v606, %v605
    %v652 = vpack.c.b16 %v608, %v607
    %v653 = vpack.c.b16 %v610, %v609
    %v654 = vpack.c.b16 %v612, %v611
    %v655 = vpack.c.b16 %v614, %v613
    %v656 = vpack.c.b16 %v616, %v615
    %v657 = vpack.c.b16 %v618, %v617
    %v658 = vpack.c.b16 %v620, %v619
    %v659 = vpack.c.b16 %v622, %v621
    %v660 = vpack.c.b16 %v624, %v623
    %v661 = vpack.c.b16 %v626, %v625
    %v662 = vpack.c.b16 %v628, %v627
    %v663 = vpack.c.b16 %v630, %v629
    %v664 = vpack.c.b16 %v632, %v631
    %697 = vmatprep.subr.bf16.mxu0 0
    %698 = vmatpush1.bf16.msra.mxu0 %v640
    %699 = vmatprep.subr.bf16.mxu0 0
    %700 = vmatpush1.bf16.msra.mxu0 %v639
    %701 = vmatprep.subr.bf16.mxu0 0
    %702 = vmatpush1.bf16.msra.mxu0 %v638
    %703 = vmatprep.subr.bf16.mxu0 0
    %704 = vmatpush1.bf16.msra.mxu0 %v637
    %705 = vmatprep.subr.bf16.mxu0 0
    %706 = vmatpush1.bf16.msra.mxu0 %v636
    %707 = vmatprep.subr.bf16.mxu0 0
    %708 = vmatpush1.bf16.msra.mxu0 %v635
    %709 = vmatprep.subr.bf16.mxu0 0
    %710 = vmatpush1.bf16.msra.mxu0 %v634
    %711 = vmatprep.subr.bf16.mxu0 0
    %712 = vmatpush1.bf16.msra.mxu0 %v633
    %713 = vmatprep.subr.bf16.mxu0 0
    %714 = vmatpush2.bf16.msra.mxu0 %v648
    %715 = vmatprep.subr.bf16.mxu0 0
    %716 = vmatpush2.bf16.msra.mxu0 %v647
    %717 = vmatprep.subr.bf16.mxu0 0
    %718 = vmatpush2.bf16.msra.mxu0 %v646
    %719 = vmatprep.subr.bf16.mxu0 0
    %720 = vmatpush2.bf16.msra.mxu0 %v645
    %721 = vmatprep.subr.bf16.mxu0 0
    %722 = vmatpush2.bf16.msra.mxu0 %v644
    %723 = vmatprep.subr.bf16.mxu0 0
    %724 = vmatpush2.bf16.msra.mxu0 %v643
    %725 = vmatprep.subr.bf16.mxu0 0
    %726 = vmatpush2.bf16.msra.mxu0 %v642
    %727 = vmatprep.subr.bf16.mxu0 0
    %728 = vmatpush2.bf16.msra.mxu0 %v641
    %729 = vmatprep.mubr.bf16.mxu0 %v431
    %730 = vmatmul.mubr.bf16.gmra.mxu0 %v430
    %v731 = vpop.f32.mrf.mxu0
    %v732 = vadd.f32 %v503, %v731
    %v733 = vpop.f32.mrf.mxu0
    %v734 = vpop.f32.mrf.mxu0
    %v735 = vadd.f32 %v503, %v734
    %v736 = vpop.f32.mrf.mxu0
    %737 = vdwg.mxu0
    %738 = vmatprep.subr.bf16.mxu0 0
    %739 = vmatpush1.bf16.msra.mxu0 %v656
    %740 = vmatprep.subr.bf16.mxu0 0
    %741 = vmatpush1.bf16.msra.mxu0 %v655
    %742 = vmatprep.subr.bf16.mxu0 0
    %743 = vmatpush1.bf16.msra.mxu0 %v654
    %744 = vmatprep.subr.bf16.mxu0 0
    %745 = vmatpush1.bf16.msra.mxu0 %v653
    %746 = vmatprep.subr.bf16.mxu0 0
    %747 = vmatpush1.bf16.msra.mxu0 %v652
    %748 = vmatprep.subr.bf16.mxu0 0
    %749 = vmatpush1.bf16.msra.mxu0 %v651
    %750 = vmatprep.subr.bf16.mxu0 0
    %751 = vmatpush1.bf16.msra.mxu0 %v650
    %752 = vmatprep.subr.bf16.mxu0 0
    %753 = vmatpush1.bf16.msra.mxu0 %v649
    %754 = vmatprep.subr.bf16.mxu0 0
    %755 = vmatpush2.bf16.msra.mxu0 %v664
    %756 = vmatprep.subr.bf16.mxu0 0
    %757 = vmatpush2.bf16.msra.mxu0 %v663
    %758 = vmatprep.subr.bf16.mxu0 0
    %759 = vmatpush2.bf16.msra.mxu0 %v662
    %760 = vmatprep.subr.bf16.mxu0 0
    %761 = vmatpush2.bf16.msra.mxu0 %v661
    %762 = vmatprep.subr.bf16.mxu0 0
    %763 = vmatpush2.bf16.msra.mxu0 %v660
    %764 = vmatprep.subr.bf16.mxu0 0
    %765 = vmatpush2.bf16.msra.mxu0 %v659
    %766 = vmatprep.subr.bf16.mxu0 0
    %767 = vmatpush2.bf16.msra.mxu0 %v658
    %768 = vmatprep.subr.bf16.mxu0 0
    %769 = vmatpush2.bf16.msra.mxu0 %v657
    %770 = vmatprep.mubr.bf16.mxu0 %v433
    %771 = vmatmul.mubr.bf16.gmra.mxu0 %v432
    %v772 = vpop.f32.mrf.mxu0
    %v773 = vadd.f32 %v732, %v772
    %v774 = vpop.f32.mrf.mxu0
    %v775 = vpop.f32.mrf.mxu0
    %v776 = vadd.f32 %v735, %v775
    %v777 = vpop.f32.mrf.mxu0
    %778 = vdwg.mxu0
    %779 = vst [vmem:[#allocation8] sm:$0xff] %v773
    %780 = vst [vmem:[#allocation8 + $0x8] sm:$0xff] %v776
    // Predicated region
    $region34: #{mae_mlp.1} parent=1 // pred_check
      _
    $region35: #{mae_mlp.1} parent=1 // pred_check_branch
      %782 = sbr.rel (0) target = $region37
    $region36: #{mae_mlp.1} parent=1 // pred_region
      %s784 = ssub.s32 256, 256
      %785 = vsyncadd [#allocation4], %s784
      %s786 = sshll.u32 [#allocation8], 4
      %s787 = int_to_ptr.vmem [resolvable:$true] %s786
      %792 = dma.vmem_to_hbm [thread:$0]  %s787, 256, %s5, [#allocation4], 128, 128, 8
    $region37: #{mae_mlp.1} parent=1 // pred_fallthru
      _
    // Predicated region
    $region38: #{mae_mlp.1} parent=1 // pred_check
      _
    $region39: #{mae_mlp.1} parent=1 // pred_check_branch
      %794 = sbr.rel (0) target = $region41
    $region40: #{mae_mlp.1} parent=1 // pred_region
      %795 = dma.done [#allocation4], 256
    $region41: #{mae_mlp.1} parent=1 // pred_fallthru
      _
    %796 = vsyncpa [#allocation3], 1
    %797 = vsyncpa [#allocation6], 1
    %798 = vsyncpa [#allocation4], 1

</llo_original>
